<compile_context>
chip_gen: v6e
topology: v6e:2x2x1
jax: 0.10.0
libtpu: 0.0.40
codegen_flags: <defaults>
</compile_context>

<pallas_src>
import jax
import jax.numpy as jnp
from jax.experimental import pallas as pl
from jax.experimental.pallas import tpu as pltpu


def _round_up(x, m):
    return ((x + m - 1) // m) * m


def _vmem_capacity_bytes():
    try:
        return int(pltpu.get_tpu_info().vmem_capacity_bytes)
    except Exception:
        return 64 * 1024 * 1024  # conservative fallback (v7x per-TensorCore)


# ---------------------------------------------------------------------------
# Pallas kernel: one grid step == TB batch rows, lane-dense (TB, N*D) layout.
# ---------------------------------------------------------------------------
def _complex_tile_kernel(packed_ref, sel_ref, out_ref):
    """packed_ref: (6, TB, NDp) bf16; sel_ref: (NDp, N) f32; out_ref: (1, TB) f32."""
    f32 = jnp.float32
    # Ref-indexed static slices (zero-cost views); upcast to f32 immediately
    # (v5e VPU has no bf16 arithmetic; accumulation stays f32 on all gens).
    h_re = packed_ref[0].astype(f32)
    h_im = packed_ref[1].astype(f32)
    t_re = packed_ref[2].astype(f32)
    t_im = packed_ref[3].astype(f32)
    sym = h_re * t_re + h_im * t_im
    asym = h_re * t_im - h_im * t_re
    terms = packed_ref[4].astype(f32) * sym + packed_ref[5].astype(f32) * asym  # (TB, NDp)

    # Per-candidate D-reduce as an MXU matmul against the static block-of-ones
    # selector; keeps the lane axis dense instead of reducing a 32-wide axis.
    s = jnp.dot(terms, sel_ref[...], preferred_element_type=f32)  # (TB, N)

    # NLL of the truth candidate (index 0) via logsumexp — no softmax divide.
    m = jnp.max(s, axis=-1, keepdims=True)
    lse = m + jnp.log(jnp.sum(jnp.exp(s - m), axis=-1, keepdims=True))
    nll = lse - s[:, 0:1]                                          # (TB, 1)

    tb = out_ref.shape[1]
    out_ref[...] = nll.reshape(1, tb).astype(out_ref.dtype)        # lane-dense store


def _per_row_nll(packed, n_cand, depth):
    """packed: (6, B, N*D) bf16 -> (B,) f32 per-row NLL."""
    six, b, nd = packed.shape
    assert six == 6 and nd == n_cand * depth

    nd_pad = _round_up(nd, 128)                    # lane-dense last dim

    # --- per-generation tile sizing -------------------------------------
    vmem_cap = _vmem_capacity_bytes()              # 128 MiB v5e/v6e, 64 MiB v7x/TC
    vmem_limit = (vmem_cap * 3) // 4               # ~96 MiB v5e/v6e, ~48 MiB v7x
    # VMEM per batch row: double-buffered bf16 input block + ~8 full-tile f32
    # elementwise temporaries (six operands, sym/asym/terms live set).
    vmem_per_row = 2 * (6 * nd_pad * 2) + 8 * nd_pad * 4
    tb_budget = max(8, ((vmem_limit // 2) // vmem_per_row) // 8 * 8)
    tb_budget = min(tb_budget, 1024)               # unroll / compile-time sanity cap

    b_pad8 = _round_up(b, 8)
    n_tiles = pl.cdiv(b_pad8, tb_budget)
    if b_pad8 >= 16:
        n_tiles = max(n_tiles, 2)                  # v7x: >=2 steps so both TCs get work
    tb = _round_up(pl.cdiv(b_pad8, n_tiles), 8)
    n_tiles = pl.cdiv(b_pad8, tb)
    b_pad = n_tiles * tb

    packed = jnp.pad(packed, ((0, 0), (0, b_pad - b), (0, nd_pad - nd)))

    # Static (NDp, N) selector: column n sums the n-th contiguous D-chunk.
    sel = (jnp.arange(nd_pad)[:, None] // depth
           == jnp.arange(n_cand)[None, :]).astype(jnp.float32)

    # TODO(synk): if DMA is still exposed after enlarging blocks, add
    #             pipeline_mode=pl.Buffered(3) on the packed BlockSpec.
    out = pl.pallas_call(
        _complex_tile_kernel,
        out_shape=jax.ShapeDtypeStruct((n_tiles, tb), jnp.float32),
        grid_spec=pltpu.PrefetchScalarGridSpec(
            num_scalar_prefetch=0,
            grid=(n_tiles,),
            in_specs=[
                pl.BlockSpec((6, tb, nd_pad), lambda i: (0, i, 0)),
                pl.BlockSpec((nd_pad, n_cand), lambda i: (0, 0)),   # resident selector
            ],
            out_specs=pl.BlockSpec((1, tb), lambda i: (i, 0)),
        ),
        compiler_params=pltpu.CompilerParams(
            dimension_semantics=("parallel",),
            vmem_limit_bytes=vmem_limit,
        ),
    )(packed, sel)

    # Padded rows produce log(N); they are sliced off here (do NOT sum over the
    # padded output directly).
    return out.reshape(-1)[:b]


# ---------------------------------------------------------------------------
# JAX glue (gather / constraint / regularization / final scalar reduction)
# ---------------------------------------------------------------------------
def _l2_normalize_rows(w):
    """F.normalize(dim=1) semantics: x / max(||x||, 1e-12). Also returns row ss."""
    ss = jnp.sum(w * w, axis=1, keepdims=True)
    return w * jax.lax.rsqrt(jnp.maximum(ss, 1e-24)), ss


def complex_forward(params, heads, tails, rels, reg):
    """Equivalent of ComplEx.forward: returns a scalar loss."""
    ent_re, ent_im, rel_re, rel_im = params

    # constraint(): normalize entity tables once; squared sums reused below.
    ent_re_n, ss_re = _l2_normalize_rows(ent_re)
    ent_im_n, ss_im = _l2_normalize_rows(ent_im)

    b, n = heads.shape
    d = ent_re.shape[1]

    # Gather + pack as bf16 (halves HBM transport of the packed intermediate);
    # all in-kernel arithmetic stays f32.
    cdt = jnp.bfloat16
    e_re_b = ent_re_n.astype(cdt)
    e_im_b = ent_im_n.astype(cdt)
    r_re_b = rel_re.astype(cdt)
    r_im_b = rel_im.astype(cdt)
    packed = jnp.stack(
        [e_re_b[heads], e_im_b[heads],
         e_re_b[tails], e_im_b[tails],
         r_re_b[rels], r_im_b[rels]],
        axis=0,
    ).reshape(6, b, n * d)                                   # (6, B, N*D)

    nll = _per_row_nll(packed, n, d)                         # (B,)
    loss = jnp.sum(nll)

    if reg == 0.0:
        return loss

    # get_regularization() after constraint(): reuse per-row squared sums
    # (sum(normalized_row^2) == ss / max(ss, eps)) — no second pass over the
    # entity tables. Relation tables are tiny, keep the direct sum.
    penalty = 0.5 * (jnp.sum(ss_re / jnp.maximum(ss_re, 1e-24))
                     + jnp.sum(ss_im / jnp.maximum(ss_im, 1e-24))
                     + jnp.sum(rel_re ** 2) + jnp.sum(rel_im ** 2))
    return loss + reg * penalty


def complex_forward_ref(params, heads, tails, rels, reg):
    """Pure-JAX f32 reference mirroring the PyTorch module (for validation)."""
    ent_re, ent_im, rel_re, rel_im = params
    ent_re_n, _ = _l2_normalize_rows(ent_re)
    ent_im_n, _ = _l2_normalize_rows(ent_im)
    h_re, h_im = ent_re_n[heads], ent_im_n[heads]
    t_re, t_im = ent_re_n[tails], ent_im_n[tails]
    r_re, r_im = rel_re[rels], rel_im[rels]
    score = (jnp.sum(r_re * h_re * t_re, -1) + jnp.sum(r_re * h_im * t_im, -1)
             + jnp.sum(r_im * h_re * t_im, -1) - jnp.sum(r_im * h_im * t_re, -1))
    probs = jax.nn.softmax(score, axis=-1)
    truth_logp = jnp.log(probs[:, 0] + 1e-30)
    loss = jnp.sum(-truth_logp)
    if reg == 0.0:
        return loss
    penalty = 0.5 * (jnp.sum(ent_re_n ** 2) + jnp.sum(ent_im_n ** 2)
                     + jnp.sum(rel_re ** 2) + jnp.sum(rel_im ** 2))
    return loss + reg * penalty


def init_params(key, n_ent, n_rel, depth):
    """Deterministic init mimicking ComplEx.initialize(): xavier_normal + rel L2-norm."""
    k1, k2, k3, k4 = jax.random.split(key, 4)

    def xavier_normal(k, n, d):
        std = (2.0 / (n + d)) ** 0.5
        return std * jax.random.normal(k, (n, d), dtype=jnp.float32)

    ent_re = xavier_normal(k1, n_ent, depth)
    ent_im = xavier_normal(k2, n_ent, depth)
    rel_re = _l2_normalize_rows(xavier_normal(k3, n_rel, depth))[0]
    rel_im = _l2_normalize_rows(xavier_normal(k4, n_rel, depth))[0]
    return ent_re, ent_im, rel_re, rel_im


if __name__ == "__main__":
    # Small, forward-consistent shapes.
    n_ent, n_rel, depth = 50, 12, 32     # configs.dim = 32
    B, N = 4, 8                          # batch of 4 queries, 8 candidates each
    reg = 0.01                           # configs.reg

    key = jax.random.PRNGKey(0)
    kp, kh, kt, kr = jax.random.split(key, 4)

    params = init_params(kp, n_ent, n_rel, depth)
    heads = jax.random.randint(kh, (B, N), 0, n_ent, dtype=jnp.int32)
    tails = jax.random.randint(kt, (B, N), 0, n_ent, dtype=jnp.int32)
    rels = jax.random.randint(kr, (B, N), 0, n_rel, dtype=jnp.int32)

    loss = jax.block_until_ready(complex_forward(params, heads, tails, rels, reg))
    loss_ref = jax.block_until_ready(
        complex_forward_ref(params, heads, tails, rels, reg))

    assert jnp.isfinite(loss), "non-finite loss from Pallas kernel"
    # Tolerance loosened relative to the f32 reference because operand transport
    # is bf16 (compute stays f32); expected deviation here is ~1e-3 absolute.
    assert jnp.allclose(loss, loss_ref, rtol=1e-2, atol=1e-2), (loss, loss_ref)

    print("KERNEL_OK")
</pallas_src>

<mosaic_0001>
module attributes {stable_mosaic.version = 11 : i64} {
  func.func @_complex_tile_kernel(%arg0: i32, %arg1: memref<6x8x256xbf16, #tpu.memory_space<vmem>>, %arg2: memref<256x8xf32, #tpu.memory_space<vmem>>, %arg3: memref<1x8xf32, #tpu.memory_space<vmem>>) attributes {dimension_semantics = [#tpu.dimension_semantics<parallel>], iteration_bounds = array<i64: 1>, scalar_prefetch = 0 : i64, scratch_operands = 0 : i64, tpu.core_type = #tpu.core_type<tc>, window_params = [{transform_indices = @transform_0, window_bounds = array<i64: 6, 8, 256>}, {pipeline_mode = #tpu.pipeline_mode<synchronous>, transform_indices = @transform_1, window_bounds = array<i64: 256, 8>}, {transform_indices = @transform_2, window_bounds = array<i64: 1, 8>}]} {
    %c0 = arith.constant 0 : index
    %c0_0 = arith.constant 0 : index
    %c0_1 = arith.constant 0 : index
    %0 = vector.load %arg1[%c0, %c0_0, %c0_1] : memref<6x8x256xbf16, #tpu.memory_space<vmem>>, vector<1x8x256xbf16>
    %1 = vector.shape_cast %0 : vector<1x8x256xbf16> to vector<8x256xbf16>
    %2 = arith.extf %1 : vector<8x256xbf16> to vector<8x256xf32>
    %c1 = arith.constant 1 : index
    %c0_2 = arith.constant 0 : index
    %c0_3 = arith.constant 0 : index
    %3 = vector.load %arg1[%c1, %c0_2, %c0_3] : memref<6x8x256xbf16, #tpu.memory_space<vmem>>, vector<1x8x256xbf16>
    %4 = vector.shape_cast %3 : vector<1x8x256xbf16> to vector<8x256xbf16>
    %5 = arith.extf %4 : vector<8x256xbf16> to vector<8x256xf32>
    %c2 = arith.constant 2 : index
    %c0_4 = arith.constant 0 : index
    %c0_5 = arith.constant 0 : index
    %6 = vector.load %arg1[%c2, %c0_4, %c0_5] : memref<6x8x256xbf16, #tpu.memory_space<vmem>>, vector<1x8x256xbf16>
    %7 = vector.shape_cast %6 : vector<1x8x256xbf16> to vector<8x256xbf16>
    %8 = arith.extf %7 : vector<8x256xbf16> to vector<8x256xf32>
    %c3 = arith.constant 3 : index
    %c0_6 = arith.constant 0 : index
    %c0_7 = arith.constant 0 : index
    %9 = vector.load %arg1[%c3, %c0_6, %c0_7] : memref<6x8x256xbf16, #tpu.memory_space<vmem>>, vector<1x8x256xbf16>
    %10 = vector.shape_cast %9 : vector<1x8x256xbf16> to vector<8x256xbf16>
    %11 = arith.extf %10 : vector<8x256xbf16> to vector<8x256xf32>
    %12 = arith.mulf %2, %8 : vector<8x256xf32>
    %13 = arith.mulf %5, %11 : vector<8x256xf32>
    %14 = arith.addf %12, %13 : vector<8x256xf32>
    %15 = arith.mulf %2, %11 : vector<8x256xf32>
    %16 = arith.mulf %5, %8 : vector<8x256xf32>
    %17 = arith.subf %15, %16 : vector<8x256xf32>
    %c4 = arith.constant 4 : index
    %c0_8 = arith.constant 0 : index
    %c0_9 = arith.constant 0 : index
    %18 = vector.load %arg1[%c4, %c0_8, %c0_9] : memref<6x8x256xbf16, #tpu.memory_space<vmem>>, vector<1x8x256xbf16>
    %19 = vector.shape_cast %18 : vector<1x8x256xbf16> to vector<8x256xbf16>
    %20 = arith.extf %19 : vector<8x256xbf16> to vector<8x256xf32>
    %21 = arith.mulf %20, %14 : vector<8x256xf32>
    %c5 = arith.constant 5 : index
    %c0_10 = arith.constant 0 : index
    %c0_11 = arith.constant 0 : index
    %22 = vector.load %arg1[%c5, %c0_10, %c0_11] : memref<6x8x256xbf16, #tpu.memory_space<vmem>>, vector<1x8x256xbf16>
    %23 = vector.shape_cast %22 : vector<1x8x256xbf16> to vector<8x256xbf16>
    %24 = arith.extf %23 : vector<8x256xbf16> to vector<8x256xf32>
    %25 = arith.mulf %24, %17 : vector<8x256xf32>
    %26 = arith.addf %21, %25 : vector<8x256xf32>
    %c0_12 = arith.constant 0 : index
    %c0_13 = arith.constant 0 : index
    %27 = vector.load %arg2[%c0_12, %c0_13] : memref<256x8xf32, #tpu.memory_space<vmem>>, vector<256x8xf32>
    %cst = arith.constant dense<0.000000e+00> : vector<8x8xf32>
    %28 = tpu.matmul %26, %27, %cst {dimension_numbers = #tpu.dot_dimension_numbers<[1], [0], [0], [1], [0, 0, 1, 1], [], []>} : vector<8x256xf32>, vector<256x8xf32>, vector<8x8xf32> -> vector<8x8xf32>
    %cst_14 = arith.constant dense<0xFF800000> : vector<8xf32>
    %29 = vector.multi_reduction <maximumf>, %28, %cst_14 [1] : vector<8x8xf32> to vector<8xf32>
    %30 = vector.shape_cast %29 : vector<8xf32> to vector<8x1xf32>
    %31 = vector.broadcast %30 : vector<8x1xf32> to vector<8x8xf32>
    %32 = arith.subf %28, %31 : vector<8x8xf32>
    %33 = math.exp %32 : vector<8x8xf32>
    %cst_15 = arith.constant dense<0.000000e+00> : vector<8xf32>
    %34 = vector.multi_reduction <add>, %33, %cst_15 [1] : vector<8x8xf32> to vector<8xf32>
    %35 = vector.shape_cast %34 : vector<8xf32> to vector<8x1xf32>
    %36 = math.log %35 : vector<8x1xf32>
    %37 = arith.addf %30, %36 : vector<8x1xf32>
    %38 = vector.extract_strided_slice %28 {offsets = [0, 0], sizes = [8, 1], strides = [1, 1]} : vector<8x8xf32> to vector<8x1xf32>
    %39 = arith.subf %37, %38 : vector<8x1xf32>
    %40 = vector.shape_cast %39 : vector<8x1xf32> to vector<1x8xf32>
    %c0_16 = arith.constant 0 : index
    %c0_17 = arith.constant 0 : index
    %41 = vector.load %arg3[%c0_16, %c0_17] : memref<1x8xf32, #tpu.memory_space<vmem>>, vector<1x8xf32>
    tpu.vector_store %arg3[%c0_16, %c0_17], %40 {strides = array<i32>} : memref<1x8xf32, #tpu.memory_space<vmem>>, vector<1x8xf32>,
    return
  }
  func.func @transform_0(%arg0: i32) -> (i32, i32, i32) {
    %c0_i32 = arith.constant 0 : i32
    %c0_i32_0 = arith.constant 0 : i32
    %c0_i32_1 = arith.constant 0 : i32
    return %c0_i32, %arg0, %c0_i32_0 : i32, i32, i32
  }
  func.func @transform_1(%arg0: i32) -> (i32, i32) {
    %c0_i32 = arith.constant 0 : i32
    %c0_i32_0 = arith.constant 0 : i32
    %c0_i32_1 = arith.constant 0 : i32
    return %c0_i32, %c0_i32_0 : i32, i32
  }
  func.func @transform_2(%arg0: i32) -> (i32, i32) {
    %c0_i32 = arith.constant 0 : i32
    %c0_i32_0 = arith.constant 0 : i32
    return %arg0, %c0_i32 : i32, i32
  }
}

</mosaic_0001>

<llo_original>
// kernel: tpu_custom_call.1
$region0: #{tpu_custom_call.1}
  #allocation0 [shape = 'u32[]', space=smem, size = 0x4, offset = 0x4, fixed_abs, tag = 'smem constant byte address 0x4 - core index']
  #allocation1 [shape = 'u32[144,128]{1,0:T(1,128)}', space=vmem, size = 0x12000, scoped, tag = 'internal scratch']
  %s0 = inlined_call_operand.vmem [shape: bf16[6,8,256], index: 0, kind: input, shape index: {}]
  %s1 = inlined_call_operand.vmem [shape: f32[256,8], index: 1, kind: input, shape index: {}]
  %s2 = inlined_call_operand.hbm [shape: f32[1,8], index: 2, kind: output, shape index: {}]
  %s3 = sld [smem:[#allocation0]]
  $region18: #{tpu_custom_call.1} parent=0
    _
  %s5 = ssub.s32 1, %s3
  %s6 = scalar_select 0, %s5, %s3
  $region1: #{tpu_custom_call.1} parent=0
    #allocation2 [shape = 'u8[512]{0}', space=vmem, size = 0x400, scoped, tag = 'output window, operand 0, single buffered']
    #allocation3 [shape = 's32[1]{0}', space=sflag, size = 0x4, scoped, tag = 'scoped memory for tpu_custom_call.1']
    %7 = vsyncpa [#allocation3], 0
    // Predicated region
    $region2: #{tpu_custom_call.1} parent=1 // pred_check
      _
    $region3: #{tpu_custom_call.1} parent=1 // pred_check_branch
      %9 = sbr.rel (0) target = $region5
    $region4: #{tpu_custom_call.1} parent=1 // pred_region
      _
    $region5: #{tpu_custom_call.1} parent=1 // pred_fallthru
      _
    // Predicated region
    $region6: #{tpu_custom_call.1} parent=1 // pred_check
      _
    $region7: #{tpu_custom_call.1} parent=1 // pred_check_branch
      %11 = sbr.rel (0) target = $region9
    $region8: #{tpu_custom_call.1} parent=1 // pred_region
      _
    $region9: #{tpu_custom_call.1} parent=1 // pred_fallthru
      _
    %v12 = vld [vmem:[%s0] sm:$0xff]
    %v13 = vunpack.c.l.bf16 %v12
    %v14 = vunpack.c.h.bf16 %v12
    %s15 = scalar_lea.vmem %s0, 8
    %v16 = vld [vmem:[%s15] sm:$0xff]
    %v17 = vunpack.c.l.bf16 %v16
    %v18 = vunpack.c.h.bf16 %v16
    %s19 = scalar_lea.vmem %s0, 16
    %v20 = vld [vmem:[%s19] sm:$0xff]
    %v21 = vunpack.c.l.bf16 %v20
    %v22 = vunpack.c.h.bf16 %v20
    %s23 = scalar_lea.vmem %s0, 24
    %v24 = vld [vmem:[%s23] sm:$0xff]
    %v25 = vunpack.c.l.bf16 %v24
    %v26 = vunpack.c.h.bf16 %v24
    %v27 = vmul.f32 %v13, %v21
    %v28 = vmul.f32 %v14, %v22
    %v29 = vmul.f32 %v17, %v25
    %v30 = vmul.f32 %v18, %v26
    %v31 = vadd.f32 %v27, %v29
    %v32 = vadd.f32 %v28, %v30
    %v33 = vmul.f32 %v13, %v25
    %v34 = vmul.f32 %v14, %v26
    %v35 = vmul.f32 %v17, %v21
    %v36 = vmul.f32 %v18, %v22
    %v37 = vsub.f32 %v33, %v35
    %v38 = vsub.f32 %v34, %v36
    %s39 = scalar_lea.vmem %s0, 32
    %v40 = vld [vmem:[%s39] sm:$0xff]
    %v41 = vunpack.c.l.bf16 %v40
    %v42 = vunpack.c.h.bf16 %v40
    %v43 = vmul.f32 %v41, %v31
    %v44 = vmul.f32 %v42, %v32
    %s45 = scalar_lea.vmem %s0, 40
    %v46 = vld [vmem:[%s45] sm:$0xff]
    %v47 = vunpack.c.l.bf16 %v46
    %v48 = vunpack.c.h.bf16 %v46
    %v49 = vmul.f32 %v47, %v37
    %v50 = vmul.f32 %v48, %v38
    %v51 = vadd.f32 %v43, %v49
    %v52 = vadd.f32 %v44, %v50
    %v53 = vld [vmem:[%s1] sm:$0xff]
    %v54 = vld [vmem:[%s1 + $0x8] sm:$0xff]
    %v55 = vld [vmem:[%s1 + $0x10] sm:$0xff]
    %v56 = vld [vmem:[%s1 + $0x18] sm:$0xff]
    %v57 = vld [vmem:[%s1 + $0x20] sm:$0xff]
    %v58 = vld [vmem:[%s1 + $0x28] sm:$0xff]
    %v59 = vld [vmem:[%s1 + $0x30] sm:$0xff]
    %v60 = vld [vmem:[%s1 + $0x38] sm:$0xff]
    %v61 = vld [vmem:[%s1 + $0x40] sm:$0xff]
    %v62 = vld [vmem:[%s1 + $0x48] sm:$0xff]
    %v63 = vld [vmem:[%s1 + $0x50] sm:$0xff]
    %v64 = vld [vmem:[%s1 + $0x58] sm:$0xff]
    %v65 = vld [vmem:[%s1 + $0x60] sm:$0xff]
    %v66 = vld [vmem:[%s1 + $0x68] sm:$0xff]
    %v67 = vld [vmem:[%s1 + $0x70] sm:$0xff]
    %v68 = vld [vmem:[%s1 + $0x78] sm:$0xff]
    %v69 = vld [vmem:[%s1 + $0x80] sm:$0xff]
    %v70 = vld [vmem:[%s1 + $0x88] sm:$0xff]
    %v71 = vld [vmem:[%s1 + $0x90] sm:$0xff]
    %v72 = vld [vmem:[%s1 + $0x98] sm:$0xff]
    %v73 = vld [vmem:[%s1 + $0xa0] sm:$0xff]
    %v74 = vld [vmem:[%s1 + $0xa8] sm:$0xff]
    %v75 = vld [vmem:[%s1 + $0xb0] sm:$0xff]
    %v76 = vld [vmem:[%s1 + $0xb8] sm:$0xff]
    %v77 = vld [vmem:[%s1 + $0xc0] sm:$0xff]
    %v78 = vld [vmem:[%s1 + $0xc8] sm:$0xff]
    %v79 = vld [vmem:[%s1 + $0xd0] sm:$0xff]
    %v80 = vld [vmem:[%s1 + $0xd8] sm:$0xff]
    %v81 = vld [vmem:[%s1 + $0xe0] sm:$0xff]
    %v82 = vld [vmem:[%s1 + $0xe8] sm:$0xff]
    %v83 = vld [vmem:[%s1 + $0xf0] sm:$0xff]
    %v84 = vld [vmem:[%s1 + $0xf8] sm:$0xff]
    %85 = vmatprep.subr.mxu0 0.0
    %86 = vmatpush1.msra.mxu0 %v68
    %87 = vmatprep.subr.mxu0 0.0
    %88 = vmatpush1.msra.mxu0 %v67
    %89 = vmatprep.subr.mxu0 0.0
    %90 = vmatpush1.msra.mxu0 %v66
    %91 = vmatprep.subr.mxu0 0.0
    %92 = vmatpush1.msra.mxu0 %v65
    %93 = vmatprep.subr.mxu0 0.0
    %94 = vmatpush1.msra.mxu0 %v64
    %95 = vmatprep.subr.mxu0 0.0
    %96 = vmatpush1.msra.mxu0 %v63
    %97 = vmatprep.subr.mxu0 0.0
    %98 = vmatpush1.msra.mxu0 %v62
    %99 = vmatprep.subr.mxu0 0.0
    %100 = vmatpush1.msra.mxu0 %v61
    %101 = vmatprep.subr.mxu0 0.0
    %102 = vmatpush1.msra.mxu0 %v60
    %103 = vmatprep.subr.mxu0 0.0
    %104 = vmatpush1.msra.mxu0 %v59
    %105 = vmatprep.subr.mxu0 0.0
    %106 = vmatpush1.msra.mxu0 %v58
    %107 = vmatprep.subr.mxu0 0.0
    %108 = vmatpush1.msra.mxu0 %v57
    %109 = vmatprep.subr.mxu0 0.0
    %110 = vmatpush1.msra.mxu0 %v56
    %111 = vmatprep.subr.mxu0 0.0
    %112 = vmatpush1.msra.mxu0 %v55
    %113 = vmatprep.subr.mxu0 0.0
    %114 = vmatpush1.msra.mxu0 %v54
    %115 = vmatprep.subr.mxu0 0.0
    %116 = vmatpush1.msra.mxu0 %v53
    %117 = vmatprep.subr.mxu0 0.0
    %118 = vmatpush2.msra.mxu0 %v84
    %119 = vmatprep.subr.mxu0 0.0
    %120 = vmatpush2.msra.mxu0 %v83
    %121 = vmatprep.subr.mxu0 0.0
    %122 = vmatpush2.msra.mxu0 %v82
    %123 = vmatprep.subr.mxu0 0.0
    %124 = vmatpush2.msra.mxu0 %v81
    %125 = vmatprep.subr.mxu0 0.0
    %126 = vmatpush2.msra.mxu0 %v80
    %127 = vmatprep.subr.mxu0 0.0
    %128 = vmatpush2.msra.mxu0 %v79
    %129 = vmatprep.subr.mxu0 0.0
    %130 = vmatpush2.msra.mxu0 %v78
    %131 = vmatprep.subr.mxu0 0.0
    %132 = vmatpush2.msra.mxu0 %v77
    %133 = vmatprep.subr.mxu0 0.0
    %134 = vmatpush2.msra.mxu0 %v76
    %135 = vmatprep.subr.mxu0 0.0
    %136 = vmatpush2.msra.mxu0 %v75
    %137 = vmatprep.subr.mxu0 0.0
    %138 = vmatpush2.msra.mxu0 %v74
    %139 = vmatprep.subr.mxu0 0.0
    %140 = vmatpush2.msra.mxu0 %v73
    %141 = vmatprep.subr.mxu0 0.0
    %142 = vmatpush2.msra.mxu0 %v72
    %143 = vmatprep.subr.mxu0 0.0
    %144 = vmatpush2.msra.mxu0 %v71
    %145 = vmatprep.subr.mxu0 0.0
    %146 = vmatpush2.msra.mxu0 %v70
    %147 = vmatprep.subr.mxu0 0.0
    %148 = vmatpush2.msra.mxu0 %v69
    %149 = vmatprep.mubr.f32.mxu0 %v52
    %150 = vmatmul.mubr.f32.gmra.mxu0 %v51
    %v151 = vpop.f32.mrf.mxu0
    %v152 = vadd.f32 0.0, %v151
    %v153 = vpop.f32.mrf.mxu0
    %154 = vdwg.mxu0
    %vm155 = vcmask 64512
    %v156 = vsel %vm155, %v152, -inf
    %157 = vmax.xlane.f32.xlu0 %v156
    %v158 = vpop.xlane.xlu0 %157
    %v159 = vsub.f32 %v152, %v158
    %v160 = vmul.f32 %v159, 1.442695
    %v161 = vpow.pop %v160
    %v162 = vsel %vm155, %v161, 0.0
    %163 = vadd.xlane.f32.xlu0 %v162
    %v164 = vpop.xlane.xlu0 %163
    %v165 = vlog2.pop %v164
    %v166 = vmul.f32 %v165, 0.6931472
    %v167 = vadd.f32 %v158, %v166
    %v168 = vsub.f32 %v167, %v152
    %170 = vset.pattern.permute.xlu0 0
    %171 = vperm.xlu0 %170, %v168
    %v172 = vpop.permute.xlu0 %171
    %v173 = vlaneseq
    %v174 = vand.u32 %v173, 127
    %v175 = vlaneseq
    %v176 = vshrl.u32 %v175, 7
    %v177 = vsub.s32 %v174, %v176
    %v178 = vrot.slane %v172, %v177
    %vm180 = vcmask 57344
    %181 = vst.msk [vmem:[#allocation2] sm:$0x1] %vm180, %v178
    // Predicated region
    $region10: #{tpu_custom_call.1} parent=1 // pred_check
      _
    $region11: #{tpu_custom_call.1} parent=1 // pred_check_branch
      %183 = sbr.rel (0) target = $region13
    $region12: #{tpu_custom_call.1} parent=1 // pred_region
      %s185 = ssub.s32 16, 16
      %186 = vsyncadd [#allocation3], %s185
      %s188 = sshll.u32 [#allocation2], 4
      %s189 = int_to_ptr.vmem [resolvable:$true] %s188
      %191 = dma.vmem_to_hbm [thread:$0]  %s189, 16, %s2, [#allocation3]
    $region13: #{tpu_custom_call.1} parent=1 // pred_fallthru
      _
    // Predicated region
    $region14: #{tpu_custom_call.1} parent=1 // pred_check
      _
    $region15: #{tpu_custom_call.1} parent=1 // pred_check_branch
      %193 = sbr.rel (0) target = $region17
    $region16: #{tpu_custom_call.1} parent=1 // pred_region
      %194 = dma.done [#allocation3], 16
    $region17: #{tpu_custom_call.1} parent=1 // pred_fallthru
      _
    %195 = vsyncpa [#allocation3], 1

</llo_original>
